<compile_context>
chip_gen: v7x
topology: tpu7x:2x2x1
jax: 0.10.0
libtpu: 0.0.40
codegen_flags: <defaults>
</compile_context>

<pallas_src>
import jax
import jax.numpy as jnp
from jax.experimental import pallas as pl
from jax.experimental.pallas import tpu as pltpu

KSIZE = 7      # SpatialAttention kernel_size
PAD = 3        # padding for kernel_size=7


def cbam_kernel(x_ref, w1_ref, b1_ref, w2_ref, b2_ref, mavg_ref, mmax_ref, o_ref):
    """One batch element per grid step.

    x_ref   : (1, C, HW) VMEM   input, lane-dense (HW multiple of 128)
    w1_ref  : (Ch, C)    VMEM   fc1 weight (1x1 conv)
    b1_ref  : (Ch, 1)    VMEM
    w2_ref  : (C, Ch)    VMEM   fc2 weight
    b2_ref  : (C, 1)     VMEM
    mavg_ref: (HW, HW)   VMEM   Toeplitz matrix of the 7x7 conv, avg channel
    mmax_ref: (HW, HW)   VMEM   Toeplitz matrix of the 7x7 conv, max channel
    o_ref   : (1, C, HW) VMEM
    """
    x = x_ref[0]                                    # (C, HW)
    C, HW = x.shape

    # ---------------- Channel attention ----------------
    # avg pool over pixels as an MXU matvec; max pool is a lane reduce.
    inv_hw_col = jnp.full((HW, 1), 1.0 / HW, dtype=jnp.float32)
    avg_c = jnp.dot(x, inv_hw_col, preferred_element_type=jnp.float32)   # (C, 1)
    max_c = jnp.max(x, axis=1, keepdims=True)                            # (C, 1)

    # Fused MLP: run both pooled vectors through fc1/fc2 in one pass.
    v = jnp.concatenate([avg_c, max_c], axis=1)                          # (C, 2)
    h = jnp.maximum(
        jnp.dot(w1_ref[...], v, preferred_element_type=jnp.float32) + b1_ref[...],
        0.0)                                                             # (Ch, 2)
    hsum = jnp.sum(h, axis=1, keepdims=True)                             # (Ch, 1)
    # fc2(h_avg) + fc2(h_max) = W2 @ (h_avg + h_max) + 2*b2
    ca = jax.nn.sigmoid(
        jnp.dot(w2_ref[...], hsum, preferred_element_type=jnp.float32)
        + 2.0 * b2_ref[...])                                             # (C, 1)

    out1 = x * ca                                                        # (C, HW)

    # ---------------- Spatial attention ----------------
    # mean over channels as an MXU matvec; max over channels is a sublane reduce.
    mean_row = jnp.full((1, C), 1.0 / C, dtype=jnp.float32)
    avg_s = jnp.dot(mean_row, out1, preferred_element_type=jnp.float32)  # (1, HW)
    max_s = jnp.max(out1, axis=0, keepdims=True)                         # (1, HW)

    # 7x7 conv (2 in-channels -> 1 out-channel) as two Toeplitz matmuls on the MXU.
    sa_pre = (jnp.dot(avg_s, mavg_ref[...], preferred_element_type=jnp.float32)
              + jnp.dot(max_s, mmax_ref[...], preferred_element_type=jnp.float32))
    sa = jax.nn.sigmoid(sa_pre)                                          # (1, HW)

    out = jnp.maximum(out1 * sa, 0.0)                                    # relu(sa*out1)
    o_ref[0] = out.astype(o_ref.dtype)


def build_conv_matrices(w_sa, H, W, pad):
    """Toeplitz matrices M s.t. flat_out = flat_avg @ M_avg + flat_max @ M_max.

    M[p_in, p_out] = K[h_in - h_out + pad, w_in - w_out + pad] when in range,
    else 0 (this also realises the zero padding of the conv).
    """
    K = w_sa.shape[-1]
    HW = H * W
    idx = jnp.arange(HW)
    h = idx // W
    w = idx % W
    dh = h[:, None] - h[None, :] + pad      # (HW_in, HW_out)
    dw = w[:, None] - w[None, :] + pad
    valid = (dh >= 0) & (dh < K) & (dw >= 0) & (dw < K)
    dh_c = jnp.clip(dh, 0, K - 1)
    dw_c = jnp.clip(dw, 0, K - 1)
    m_avg = jnp.where(valid, w_sa[0][dh_c, dw_c], 0.0).astype(jnp.float32)
    m_max = jnp.where(valid, w_sa[1][dh_c, dw_c], 0.0).astype(jnp.float32)
    return m_avg, m_max


def mycbam_forward(x_nchw, w1, b1, w2, b2, w_sa):
    """x_nchw: (B, C, H, W).  w1:(Ch,C) b1:(Ch,) w2:(C,Ch) b2:(C,) w_sa:(2,7,7)."""
    B, C, H, W = x_nchw.shape
    Ch = w1.shape[0]
    HW = H * W

    x_flat = x_nchw.reshape(B, C, HW)                    # free contiguous reshape
    m_avg, m_max = build_conv_matrices(w_sa, H, W, PAD)  # weight-side im2col

    cost = pl.CostEstimate(
        flops=int(B * (4 * HW * HW            # two Toeplitz matmuls
                       + 4 * C * HW           # pooling + channel-mean matvecs
                       + 6 * C * HW           # elementwise scale / relu
                       + 4 * C * Ch)),        # fused MLP
        transcendentals=int(B * (C + HW)),    # sigmoids
        bytes_accessed=int(2 * B * C * HW * 4 + 2 * HW * HW * 4),
    )

    out_flat = pl.pallas_call(
        cbam_kernel,
        out_shape=jax.ShapeDtypeStruct((B, C, HW), x_nchw.dtype),
        grid=(B,),
        in_specs=[
            pl.BlockSpec((1, C, HW), lambda b: (b, 0, 0)),
            pl.BlockSpec((Ch, C), lambda b: (0, 0)),
            pl.BlockSpec((Ch, 1), lambda b: (0, 0)),
            pl.BlockSpec((C, Ch), lambda b: (0, 0)),
            pl.BlockSpec((C, 1), lambda b: (0, 0)),
            pl.BlockSpec((HW, HW), lambda b: (0, 0)),
            pl.BlockSpec((HW, HW), lambda b: (0, 0)),
        ],
        out_specs=pl.BlockSpec((1, C, HW), lambda b: (b, 0, 0)),
        compiler_params=pltpu.CompilerParams(
            dimension_semantics=("parallel",),
            vmem_limit_bytes=32 * 1024 * 1024,
        ),
        cost_estimate=cost,
    )(x_flat, w1, b1.reshape(Ch, 1), w2, b2.reshape(C, 1), m_avg, m_max)

    return out_flat.reshape(B, C, H, W)


def cbam_reference(x, w1, b1, w2, b2, w_sa):
    """Pure-JAX NCHW reference of the PyTorch forward."""
    avg = jnp.mean(x, axis=(2, 3))          # (B, C)
    mx = jnp.max(x, axis=(2, 3))            # (B, C)

    def mlp(v):                             # fc2(relu(fc1(v)))
        return jnp.maximum(v @ w1.T + b1, 0.0) @ w2.T + b2

    ca = jax.nn.sigmoid(mlp(avg) + mlp(mx))             # (B, C)
    out1 = x * ca[:, :, None, None]

    avg_s = jnp.mean(out1, axis=1, keepdims=True)       # (B,1,H,W)
    max_s = jnp.max(out1, axis=1, keepdims=True)
    m = jnp.concatenate([avg_s, max_s], axis=1)         # (B,2,H,W)
    sa = jax.lax.conv_general_dilated(
        m, w_sa[None],                                  # (1,2,7,7) OIHW
        window_strides=(1, 1), padding=[(PAD, PAD), (PAD, PAD)],
        dimension_numbers=("NCHW", "OIHW", "NCHW"))
    sa = jax.nn.sigmoid(sa)
    return jnp.maximum(out1 * sa, 0.0)


if __name__ == "__main__":
    B, C, H, W = 2, 32, 16, 16        # C=32 -> hidden = C // 16 = 2
    Ch = C // 16

    key = jax.random.PRNGKey(0)
    kx, k1, kb1, k2, kb2, ksa = jax.random.split(key, 6)

    x = jax.random.normal(kx, (B, C, H, W), dtype=jnp.float32)
    w1 = 0.1 * jax.random.normal(k1, (Ch, C), dtype=jnp.float32)     # fc1 (1x1 conv)
    b1 = 0.1 * jax.random.normal(kb1, (Ch,), dtype=jnp.float32)
    b2 = 0.1 * jax.random.normal(kb2, (C,), dtype=jnp.float32)
    w2 = 0.1 * jax.random.normal(k2, (C, Ch), dtype=jnp.float32)     # fc2 (1x1 conv)
    w_sa = 0.1 * jax.random.normal(ksa, (2, KSIZE, KSIZE), dtype=jnp.float32)  # SA conv

    out = mycbam_forward(x, w1, b1, w2, b2, w_sa)
    out = jax.block_until_ready(out)

    ref = cbam_reference(x, w1, b1, w2, b2, w_sa)
    assert out.shape == (B, C, H, W)
    assert jnp.allclose(out, ref, atol=1e-4, rtol=1e-4), float(jnp.max(jnp.abs(out - ref)))

    print("KERNEL_OK")
</pallas_src>

<mosaic_0001>
module attributes {stable_mosaic.version = 11 : i64} {
  func.func @cbam_kernel(%arg0: i32, %arg1: memref<1x32x256xf32, #tpu.memory_space<vmem>>, %arg2: memref<2x32xf32, #tpu.memory_space<vmem>>, %arg3: memref<2x1xf32, #tpu.memory_space<vmem>>, %arg4: memref<32x2xf32, #tpu.memory_space<vmem>>, %arg5: memref<32x1xf32, #tpu.memory_space<vmem>>, %arg6: memref<256x256xf32, #tpu.memory_space<vmem>>, %arg7: memref<256x256xf32, #tpu.memory_space<vmem>>, %arg8: memref<1x32x256xf32, #tpu.memory_space<vmem>>) attributes {dimension_semantics = [#tpu.dimension_semantics<parallel>], iteration_bounds = array<i64: 2>, scalar_prefetch = 0 : i64, scratch_operands = 0 : i64, tpu.core_type = #tpu.core_type<tc>, window_params = [{transform_indices = @transform_0, window_bounds = array<i64: 1, 32, 256>}, {pipeline_mode = #tpu.pipeline_mode<synchronous>, transform_indices = @transform_1, window_bounds = array<i64: 2, 32>}, {pipeline_mode = #tpu.pipeline_mode<synchronous>, transform_indices = @transform_2, window_bounds = array<i64: 2, 1>}, {pipeline_mode = #tpu.pipeline_mode<synchronous>, transform_indices = @transform_3, window_bounds = array<i64: 32, 2>}, {pipeline_mode = #tpu.pipeline_mode<synchronous>, transform_indices = @transform_4, window_bounds = array<i64: 32, 1>}, {pipeline_mode = #tpu.pipeline_mode<synchronous>, transform_indices = @transform_5, window_bounds = array<i64: 256, 256>}, {pipeline_mode = #tpu.pipeline_mode<synchronous>, transform_indices = @transform_6, window_bounds = array<i64: 256, 256>}, {transform_indices = @transform_7, window_bounds = array<i64: 1, 32, 256>}]} {
    %c0 = arith.constant 0 : index
    %c0_0 = arith.constant 0 : index
    %c0_1 = arith.constant 0 : index
    %0 = vector.load %arg1[%c0, %c0_0, %c0_1] : memref<1x32x256xf32, #tpu.memory_space<vmem>>, vector<1x32x256xf32>
    %1 = vector.shape_cast %0 : vector<1x32x256xf32> to vector<32x256xf32>
    %cst = arith.constant 3.906250e-03 : f32
    %2 = vector.broadcast %cst : f32 to vector<256x1xf32>
    %cst_2 = arith.constant dense<0.000000e+00> : vector<32x1xf32>
    %3 = tpu.matmul %1, %2, %cst_2 {dimension_numbers = #tpu.dot_dimension_numbers<[1], [0], [0], [1], [0, 0, 1, 1], [], []>} : vector<32x256xf32>, vector<256x1xf32>, vector<32x1xf32> -> vector<32x1xf32>
    %cst_3 = arith.constant dense<0xFF800000> : vector<32xf32>
    %4 = vector.multi_reduction <maximumf>, %1, %cst_3 [1] : vector<32x256xf32> to vector<32xf32>
    %5 = vector.shape_cast %4 : vector<32xf32> to vector<32x1xf32>
    %6 = tpu.concatenate %3, %5 in 1 : vector<32x1xf32>, vector<32x1xf32> -> vector<32x2xf32>
    %c0_4 = arith.constant 0 : index
    %c0_5 = arith.constant 0 : index
    %7 = vector.load %arg2[%c0_4, %c0_5] : memref<2x32xf32, #tpu.memory_space<vmem>>, vector<2x32xf32>
    %cst_6 = arith.constant dense<0.000000e+00> : vector<2x2xf32>
    %8 = tpu.matmul %7, %6, %cst_6 {dimension_numbers = #tpu.dot_dimension_numbers<[1], [0], [0], [1], [0, 0, 1, 1], [], []>} : vector<2x32xf32>, vector<32x2xf32>, vector<2x2xf32> -> vector<2x2xf32>
    %c0_7 = arith.constant 0 : index
    %c0_8 = arith.constant 0 : index
    %9 = vector.load %arg3[%c0_7, %c0_8] : memref<2x1xf32, #tpu.memory_space<vmem>>, vector<2x1xf32>
    %10 = vector.broadcast %9 : vector<2x1xf32> to vector<2x2xf32>
    %11 = arith.addf %8, %10 : vector<2x2xf32>
    %cst_9 = arith.constant 0.000000e+00 : f32
    %12 = vector.broadcast %cst_9 : f32 to vector<2x2xf32>
    %13 = arith.maximumf %11, %12 : vector<2x2xf32>
    %cst_10 = arith.constant dense<0.000000e+00> : vector<2xf32>
    %14 = vector.multi_reduction <add>, %13, %cst_10 [1] : vector<2x2xf32> to vector<2xf32>
    %15 = vector.shape_cast %14 : vector<2xf32> to vector<2x1xf32>
    %c0_11 = arith.constant 0 : index
    %c0_12 = arith.constant 0 : index
    %16 = vector.load %arg4[%c0_11, %c0_12] : memref<32x2xf32, #tpu.memory_space<vmem>>, vector<32x2xf32>
    %cst_13 = arith.constant dense<0.000000e+00> : vector<32x1xf32>
    %17 = tpu.matmul %16, %15, %cst_13 {dimension_numbers = #tpu.dot_dimension_numbers<[1], [0], [0], [1], [0, 0, 1, 1], [], []>} : vector<32x2xf32>, vector<2x1xf32>, vector<32x1xf32> -> vector<32x1xf32>
    %c0_14 = arith.constant 0 : index
    %c0_15 = arith.constant 0 : index
    %18 = vector.load %arg5[%c0_14, %c0_15] : memref<32x1xf32, #tpu.memory_space<vmem>>, vector<32x1xf32>
    %cst_16 = arith.constant 2.000000e+00 : f32
    %19 = vector.broadcast %cst_16 : f32 to vector<32x1xf32>
    %20 = arith.mulf %19, %18 : vector<32x1xf32>
    %21 = arith.addf %17, %20 : vector<32x1xf32>
    %22 = arith.negf %21 : vector<32x1xf32>
    %23 = math.exp %22 : vector<32x1xf32>
    %cst_17 = arith.constant 1.000000e+00 : f32
    %24 = vector.broadcast %cst_17 : f32 to vector<32x1xf32>
    %25 = arith.addf %24, %23 : vector<32x1xf32>
    %26 = arith.divf %24, %25 : vector<32x1xf32>
    %27 = vector.broadcast %26 : vector<32x1xf32> to vector<32x256xf32>
    %28 = arith.mulf %1, %27 : vector<32x256xf32>
    %cst_18 = arith.constant 3.125000e-02 : f32
    %29 = vector.broadcast %cst_18 : f32 to vector<1x32xf32>
    %cst_19 = arith.constant dense<0.000000e+00> : vector<1x256xf32>
    %30 = tpu.matmul %29, %28, %cst_19 {dimension_numbers = #tpu.dot_dimension_numbers<[1], [0], [0], [1], [0, 0, 1, 1], [], []>} : vector<1x32xf32>, vector<32x256xf32>, vector<1x256xf32> -> vector<1x256xf32>
    %cst_20 = arith.constant dense<0xFF800000> : vector<256xf32>
    %31 = vector.multi_reduction <maximumf>, %28, %cst_20 [0] : vector<32x256xf32> to vector<256xf32>
    %32 = vector.shape_cast %31 : vector<256xf32> to vector<1x256xf32>
    %c0_21 = arith.constant 0 : index
    %c0_22 = arith.constant 0 : index
    %33 = vector.load %arg6[%c0_21, %c0_22] : memref<256x256xf32, #tpu.memory_space<vmem>>, vector<256x256xf32>
    %cst_23 = arith.constant dense<0.000000e+00> : vector<1x256xf32>
    %34 = tpu.matmul %30, %33, %cst_23 {dimension_numbers = #tpu.dot_dimension_numbers<[1], [0], [0], [1], [0, 0, 1, 1], [], []>} : vector<1x256xf32>, vector<256x256xf32>, vector<1x256xf32> -> vector<1x256xf32>
    %c0_24 = arith.constant 0 : index
    %c0_25 = arith.constant 0 : index
    %35 = vector.load %arg7[%c0_24, %c0_25] : memref<256x256xf32, #tpu.memory_space<vmem>>, vector<256x256xf32>
    %cst_26 = arith.constant dense<0.000000e+00> : vector<1x256xf32>
    %36 = tpu.matmul %32, %35, %cst_26 {dimension_numbers = #tpu.dot_dimension_numbers<[1], [0], [0], [1], [0, 0, 1, 1], [], []>} : vector<1x256xf32>, vector<256x256xf32>, vector<1x256xf32> -> vector<1x256xf32>
    %37 = arith.addf %34, %36 : vector<1x256xf32>
    %38 = arith.negf %37 : vector<1x256xf32>
    %39 = math.exp %38 : vector<1x256xf32>
    %cst_27 = arith.constant 1.000000e+00 : f32
    %40 = vector.broadcast %cst_27 : f32 to vector<1x256xf32>
    %41 = arith.addf %40, %39 : vector<1x256xf32>
    %42 = arith.divf %40, %41 : vector<1x256xf32>
    %43 = vector.broadcast %42 : vector<1x256xf32> to vector<32x256xf32>
    %44 = arith.mulf %28, %43 : vector<32x256xf32>
    %cst_28 = arith.constant 0.000000e+00 : f32
    %45 = vector.broadcast %cst_28 : f32 to vector<32x256xf32>
    %46 = arith.maximumf %44, %45 : vector<32x256xf32>
    %c0_29 = arith.constant 0 : index
    %c0_30 = arith.constant 0 : index
    %c0_31 = arith.constant 0 : index
    %47 = vector.load %arg8[%c0_29, %c0_30, %c0_31] : memref<1x32x256xf32, #tpu.memory_space<vmem>>, vector<1x32x256xf32>
    %48 = vector.shape_cast %47 : vector<1x32x256xf32> to vector<32x256xf32>
    %49 = vector.shape_cast %46 : vector<32x256xf32> to vector<1x32x256xf32>
    tpu.vector_store %arg8[%c0_29, %c0_30, %c0_31], %49 {strides = array<i32>} : memref<1x32x256xf32, #tpu.memory_space<vmem>>, vector<1x32x256xf32>,
    return
  }
  func.func @transform_0(%arg0: i32) -> (i32, i32, i32) {
    %c0_i32 = arith.constant 0 : i32
    %c0_i32_0 = arith.constant 0 : i32
    %c0_i32_1 = arith.constant 0 : i32
    return %arg0, %c0_i32, %c0_i32_0 : i32, i32, i32
  }
  func.func @transform_1(%arg0: i32) -> (i32, i32) {
    %c0_i32 = arith.constant 0 : i32
    %c0_i32_0 = arith.constant 0 : i32
    %c0_i32_1 = arith.constant 0 : i32
    return %c0_i32, %c0_i32_0 : i32, i32
  }
  func.func @transform_2(%arg0: i32) -> (i32, i32) {
    %c0_i32 = arith.constant 0 : i32
    %c0_i32_0 = arith.constant 0 : i32
    %c0_i32_1 = arith.constant 0 : i32
    return %c0_i32, %c0_i32_0 : i32, i32
  }
  func.func @transform_3(%arg0: i32) -> (i32, i32) {
    %c0_i32 = arith.constant 0 : i32
    %c0_i32_0 = arith.constant 0 : i32
    %c0_i32_1 = arith.constant 0 : i32
    return %c0_i32, %c0_i32_0 : i32, i32
  }
  func.func @transform_4(%arg0: i32) -> (i32, i32) {
    %c0_i32 = arith.constant 0 : i32
    %c0_i32_0 = arith.constant 0 : i32
    %c0_i32_1 = arith.constant 0 : i32
    return %c0_i32, %c0_i32_0 : i32, i32
  }
  func.func @transform_5(%arg0: i32) -> (i32, i32) {
    %c0_i32 = arith.constant 0 : i32
    %c0_i32_0 = arith.constant 0 : i32
    %c0_i32_1 = arith.constant 0 : i32
    return %c0_i32, %c0_i32_0 : i32, i32
  }
  func.func @transform_6(%arg0: i32) -> (i32, i32) {
    %c0_i32 = arith.constant 0 : i32
    %c0_i32_0 = arith.constant 0 : i32
    %c0_i32_1 = arith.constant 0 : i32
    return %c0_i32, %c0_i32_0 : i32, i32
  }
  func.func @transform_7(%arg0: i32) -> (i32, i32, i32) {
    %c0_i32 = arith.constant 0 : i32
    %c0_i32_0 = arith.constant 0 : i32
    %c0_i32_1 = arith.constant 0 : i32
    return %arg0, %c0_i32, %c0_i32_0 : i32, i32, i32
  }
}

</mosaic_0001>

<llo_original>
// kernel: tpu_custom_call.1
$region0: #{tpu_custom_call.1}
  #allocation0 [shape = 'u32[]', space=smem, size = 0x4, offset = 0x4, fixed_abs, tag = 'smem constant byte address 0x4 - core index']
  #allocation1 [shape = 'u32[144,128]{1,0:T(1,128)}', space=vmem, size = 0x12000, scoped, tag = 'internal scratch']
  %s0 = inlined_call_operand.hbm [shape: f32[2,32,256], index: 0, kind: input, shape index: {}]
  %s1 = inlined_call_operand.vmem [shape: f32[2,32], index: 1, kind: input, shape index: {}]
  %s2 = inlined_call_operand.vmem [shape: f32[2,1], index: 2, kind: input, shape index: {}]
  %s3 = inlined_call_operand.vmem [shape: f32[32,2], index: 3, kind: input, shape index: {}]
  %s4 = inlined_call_operand.vmem [shape: f32[32,1], index: 4, kind: input, shape index: {}]
  %s5 = inlined_call_operand.hbm [shape: f32[256,256], index: 5, kind: input, shape index: {}]
  %s6 = inlined_call_operand.hbm [shape: f32[256,256], index: 6, kind: input, shape index: {}]
  %s7 = inlined_call_operand.hbm [shape: f32[2,32,256], index: 7, kind: output, shape index: {}]
  %s8 = sld [smem:[#allocation0]]
  $region73: #{tpu_custom_call.1} parent=0
    _
  %s10 = ssub.s32 1, %s8
  %s11 = scalar_select 0, %s10, %s8
  $region1: #{tpu_custom_call.1} parent=0
    #allocation2 [shape = 'u8[65536]{0}', space=vmem, size = 0x10000, scoped, tag = 'input window, operand 0']
    #allocation3 [shape = 's32[2]{0}', space=sflag, size = 0x8, scoped, tag = 'scoped memory for tpu_custom_call.1']
    #allocation4 [shape = 's32[2]{0}', space=sflag, size = 0x8, scoped, tag = 'scoped memory for tpu_custom_call.1']
    #allocation5 [shape = 'u8[262144]{0}', space=vmem, size = 0x40000, scoped, tag = 'input window, operand 5, single buffered']
    #allocation6 [shape = 's32[1]{0}', space=sflag, size = 0x4, scoped, tag = 'scoped memory for tpu_custom_call.1']
    #allocation7 [shape = 'u8[262144]{0}', space=vmem, size = 0x40000, scoped, tag = 'input window, operand 6, single buffered']
    #allocation8 [shape = 'u8[65536]{0}', space=vmem, size = 0x10000, scoped, tag = 'output window, operand 0']
    %12 = vsyncpa [#allocation3], 0
    %s13 = scalar_lea.sflag [#allocation3], 1
    %14 = vsyncpa %s13, 0
    %15 = vsyncpa [#allocation6], 0
    %16 = vsyncpa [#allocation4], 0
    %s17 = scalar_lea.sflag [#allocation4], 1
    %18 = vsyncpa %s17, 0
    loop: start=0, step=1, limit=4
    $region2: #{tpu_custom_call.1} parent=1 // loop_pre_header
      _
    $region3: #{tpu_custom_call.1} parent=1 // loop_header
      %s20 = sphi 0, %s24
      %p21 = scmp.ge.s32.totalorder %s20, 4
      %s30 = sphi 0, %s32
      %s33 = sphi 0, %s30
      %s34 = sphi 0, %s33
      %s50 = sphi 0, %s34
      %s54 = sphi 0, %s54
      %s56 = sphi 0, %s54
      %s57 = sphi 0, %s56
      %s71 = sphi 0, %s57
      %s75 = sphi 0, %s75
      %s77 = sphi 0, %s75
      %s78 = sphi 0, %s77
      %s92 = sphi 0, %s78
      %s96 = sphi 0, %s96
      %s98 = sphi 0, %s96
      %s99 = sphi 0, %s98
      %s113 = sphi 0, %s99
      %s117 = sphi 0, %s117
      %s119 = sphi 0, %s117
      %s120 = sphi 0, %s119
      %s134 = sphi 0, %s120
      %s138 = sphi 0, %s138
      %s140 = sphi 0, %s138
      %s141 = sphi 0, %s140
      %s155 = sphi 0, %s141
      %s159 = sphi 0, %s159
      %s161 = sphi 0, %s159
      %s162 = sphi 0, %s161
      %s176 = sphi 0, %s162
      %s182 = sphi 0, %s184
      %s185 = sphi 0, %s182
      %s186 = sphi 0, %s185
      %s202 = sphi 0, %s186
    $region4: #{tpu_custom_call.1} parent=1 // loop_header_branch
      %23 = sbr.rel (%p21) target = $region8
    $region5: #{tpu_custom_call.1} parent=1 // loop_body
      %s25 = ssub.s32 %s20, 1
      %s26 = ssub.s32 %s20, 2
      %s27 = sadd.s32 %s20, 1
      %s28 = ssub.s32 %s20, %s27
      %p29 = scmp.eq.s32.totalorder %s28, 0
      %s31 = sadd.s32 %s30, 1
      %s32 = scalar_select %p29, %s30, %s31
      %p35 = pneg %p29
      %p36 = scmp.eq.s32.totalorder %s20, 1
      %p37 = por %p35, %p36
      %p38 = scmp.ne.s32.totalorder %s30, %s33
      %p39 = scmp.eq.s32.totalorder %s20, 0
      %p40 = por %p38, %p39
      %p41 = scmp.ne.s32.totalorder %s30, %s33
      %p42 = scmp.eq.s32.totalorder %s25, 1
      %p43 = por %p41, %p42
      %p44 = scmp.ne.s32.totalorder %s33, %s34
      %p45 = scmp.eq.s32.totalorder %s25, 0
      %p46 = por %p44, %p45
      %p47 = scmp.ne.s32.totalorder %s33, %s34
      %p48 = scmp.eq.s32.totalorder %s26, 1
      %p49 = por %p47, %p48
      %p51 = scmp.ne.s32.totalorder %s34, %s50
      %p52 = scmp.eq.s32.totalorder %s26, 0
      %p53 = por %p51, %p52
      %s55 = sadd.s32 %s54, 1
      %p58 = scmp.eq.s32.totalorder %s20, 1
      %p59 = scmp.ne.s32.totalorder %s54, %s56
      %p60 = scmp.eq.s32.totalorder %s20, 0
      %p61 = por %p59, %p60
      %p62 = scmp.ne.s32.totalorder %s54, %s56
      %p63 = scmp.eq.s32.totalorder %s25, 1
      %p64 = por %p62, %p63
      %p65 = scmp.ne.s32.totalorder %s56, %s57
      %p66 = scmp.eq.s32.totalorder %s25, 0
      %p67 = por %p65, %p66
      %p68 = scmp.ne.s32.totalorder %s56, %s57
      %p69 = scmp.eq.s32.totalorder %s26, 1
      %p70 = por %p68, %p69
      %p72 = scmp.ne.s32.totalorder %s57, %s71
      %p73 = scmp.eq.s32.totalorder %s26, 0
      %p74 = por %p72, %p73
      %s76 = sadd.s32 %s75, 1
      %p79 = scmp.eq.s32.totalorder %s20, 1
      %p80 = scmp.ne.s32.totalorder %s75, %s77
      %p81 = scmp.eq.s32.totalorder %s20, 0
      %p82 = por %p80, %p81
      %p83 = scmp.ne.s32.totalorder %s75, %s77
      %p84 = scmp.eq.s32.totalorder %s25, 1
      %p85 = por %p83, %p84
      %p86 = scmp.ne.s32.totalorder %s77, %s78
      %p87 = scmp.eq.s32.totalorder %s25, 0
      %p88 = por %p86, %p87
      %p89 = scmp.ne.s32.totalorder %s77, %s78
      %p90 = scmp.eq.s32.totalorder %s26, 1
      %p91 = por %p89, %p90
      %p93 = scmp.ne.s32.totalorder %s78, %s92
      %p94 = scmp.eq.s32.totalorder %s26, 0
      %p95 = por %p93, %p94
      %s97 = sadd.s32 %s96, 1
      %p100 = scmp.eq.s32.totalorder %s20, 1
      %p101 = scmp.ne.s32.totalorder %s96, %s98
      %p102 = scmp.eq.s32.totalorder %s20, 0
      %p103 = por %p101, %p102
      %p104 = scmp.ne.s32.totalorder %s96, %s98
      %p105 = scmp.eq.s32.totalorder %s25, 1
      %p106 = por %p104, %p105
      %p107 = scmp.ne.s32.totalorder %s98, %s99
      %p108 = scmp.eq.s32.totalorder %s25, 0
      %p109 = por %p107, %p108
      %p110 = scmp.ne.s32.totalorder %s98, %s99
      %p111 = scmp.eq.s32.totalorder %s26, 1
      %p112 = por %p110, %p111
      %p114 = scmp.ne.s32.totalorder %s99, %s113
      %p115 = scmp.eq.s32.totalorder %s26, 0
      %p116 = por %p114, %p115
      %s118 = sadd.s32 %s117, 1
      %p121 = scmp.eq.s32.totalorder %s20, 1
      %p122 = scmp.ne.s32.totalorder %s117, %s119
      %p123 = scmp.eq.s32.totalorder %s20, 0
      %p124 = por %p122, %p123
      %p125 = scmp.ne.s32.totalorder %s117, %s119
      %p126 = scmp.eq.s32.totalorder %s25, 1
      %p127 = por %p125, %p126
      %p128 = scmp.ne.s32.totalorder %s119, %s120
      %p129 = scmp.eq.s32.totalorder %s25, 0
      %p130 = por %p128, %p129
      %p131 = scmp.ne.s32.totalorder %s119, %s120
      %p132 = scmp.eq.s32.totalorder %s26, 1
      %p133 = por %p131, %p132
      %p135 = scmp.ne.s32.totalorder %s120, %s134
      %p136 = scmp.eq.s32.totalorder %s26, 0
      %p137 = por %p135, %p136
      %s139 = sadd.s32 %s138, 1
      %p142 = scmp.eq.s32.totalorder %s20, 1
      %p143 = scmp.ne.s32.totalorder %s138, %s140
      %p144 = scmp.eq.s32.totalorder %s20, 0
      %p145 = por %p143, %p144
      %p146 = scmp.ne.s32.totalorder %s138, %s140
      %p147 = scmp.eq.s32.totalorder %s25, 1
      %p148 = por %p146, %p147
      %p149 = scmp.ne.s32.totalorder %s140, %s141
      %p150 = scmp.eq.s32.totalorder %s25, 0
      %p151 = por %p149, %p150
      %p152 = scmp.ne.s32.totalorder %s140, %s141
      %p153 = scmp.eq.s32.totalorder %s26, 1
      %p154 = por %p152, %p153
      %p156 = scmp.ne.s32.totalorder %s141, %s155
      %p157 = scmp.eq.s32.totalorder %s26, 0
      %p158 = por %p156, %p157
      %s160 = sadd.s32 %s159, 1
      %p163 = scmp.eq.s32.totalorder %s20, 1
      %p164 = scmp.ne.s32.totalorder %s159, %s161
      %p165 = scmp.eq.s32.totalorder %s20, 0
      %p166 = por %p164, %p165
      %p167 = scmp.ne.s32.totalorder %s159, %s161
      %p168 = scmp.eq.s32.totalorder %s25, 1
      %p169 = por %p167, %p168
      %p170 = scmp.ne.s32.totalorder %s161, %s162
      %p171 = scmp.eq.s32.totalorder %s25, 0
      %p172 = por %p170, %p171
      %p173 = scmp.ne.s32.totalorder %s161, %s162
      %p174 = scmp.eq.s32.totalorder %s26, 1
      %p175 = por %p173, %p174
      %p177 = scmp.ne.s32.totalorder %s162, %s176
      %p178 = scmp.eq.s32.totalorder %s26, 0
      %p179 = por %p177, %p178
      %s180 = ssub.s32 %s20, %s27
      %p181 = scmp.eq.s32.totalorder %s180, 0
      %s183 = sadd.s32 %s182, 1
      %s184 = scalar_select %p181, %s182, %s183
      %p187 = pneg %p181
      %p188 = scmp.eq.s32.totalorder %s20, 1
      %p189 = por %p187, %p188
      %p190 = scmp.ne.s32.totalorder %s182, %s185
      %p191 = scmp.eq.s32.totalorder %s20, 0
      %p192 = por %p190, %p191
      %p193 = scmp.ne.s32.totalorder %s182, %s185
      %p194 = scmp.eq.s32.totalorder %s25, 1
      %p195 = por %p193, %p194
      %p196 = scmp.ne.s32.totalorder %s185, %s186
      %p197 = scmp.eq.s32.totalorder %s25, 0
      %p198 = por %p196, %p197
      %p199 = scmp.ne.s32.totalorder %s185, %s186
      %p200 = scmp.eq.s32.totalorder %s26, 1
      %p201 = por %p199, %p200
      %p203 = scmp.ne.s32.totalorder %s186, %s202
      %p204 = scmp.eq.s32.totalorder %s26, 0
      %p205 = por %p203, %p204
      %p206 = scmp.le.s32.totalorder 1, %s20
      %p207 = scmp.lt.s32.totalorder %s20, 3
      %p208 = pnand %p206, %p207
      %p209 = pneg %p208
      // Predicated region
      $region9: #{tpu_custom_call.1} parent=5 // pred_check
        _
      $region10: #{tpu_custom_call.1} parent=5 // pred_check_branch
        %211 = sbr.rel (%p208) target = $region12
      $region11: #{tpu_custom_call.1} parent=5 // pred_region
        %s212 = ssub.s32 %s20, 1
        // Predicated region
        $region13: #{tpu_custom_call.1} parent=11 // pred_check
          %p213 = pneg %p67
        $region14: #{tpu_custom_call.1} parent=11 // pred_check_branch
          %215 = sbr.rel (%p213) target = $region16
        $region15: #{tpu_custom_call.1} parent=11 // pred_region
          _
        $region16: #{tpu_custom_call.1} parent=11 // pred_fallthru
          _
        // Predicated region
        $region17: #{tpu_custom_call.1} parent=11 // pred_check
          %p216 = pneg %p88
        $region18: #{tpu_custom_call.1} parent=11 // pred_check_branch
          %218 = sbr.rel (%p216) target = $region20
        $region19: #{tpu_custom_call.1} parent=11 // pred_region
          _
        $region20: #{tpu_custom_call.1} parent=11 // pred_fallthru
          _
        // Predicated region
        $region21: #{tpu_custom_call.1} parent=11 // pred_check
          %p219 = pneg %p109
        $region22: #{tpu_custom_call.1} parent=11 // pred_check_branch
          %221 = sbr.rel (%p219) target = $region24
        $region23: #{tpu_custom_call.1} parent=11 // pred_region
          _
        $region24: #{tpu_custom_call.1} parent=11 // pred_fallthru
          _
        // Predicated region
        $region25: #{tpu_custom_call.1} parent=11 // pred_check
          %p222 = pneg %p130
        $region26: #{tpu_custom_call.1} parent=11 // pred_check_branch
          %224 = sbr.rel (%p222) target = $region28
        $region27: #{tpu_custom_call.1} parent=11 // pred_region
          _
        $region28: #{tpu_custom_call.1} parent=11 // pred_fallthru
          _
        // Predicated region
        $region29: #{tpu_custom_call.1} parent=11 // pred_check
          %p225 = pneg %p151
        $region30: #{tpu_custom_call.1} parent=11 // pred_check_branch
          %227 = sbr.rel (%p225) target = $region32
        $region31: #{tpu_custom_call.1} parent=11 // pred_region
          %s229 = ssub.s32 8192, 8192
          %230 = vsyncadd [#allocation6], %s229
          %s231 = sshll.u32 [#allocation5], 4
          %s232 = int_to_ptr.vmem [resolvable:$true] %s231
          %237 = dma.hbm_to_vmem [thread:$0]  %s5, 8192, %s232, [#allocation6], 256, 256, 16
        $region32: #{tpu_custom_call.1} parent=11 // pred_fallthru
          _
        // Predicated region
        $region33: #{tpu_custom_call.1} parent=11 // pred_check
          %p238 = pneg %p172
        $region34: #{tpu_custom_call.1} parent=11 // pred_check_branch
          %240 = sbr.rel (%p238) target = $region36
        $region35: #{tpu_custom_call.1} parent=11 // pred_region
          %s242 = ssub.s32 8192, 8192
          %243 = vsyncadd [#allocation6], %s242
          %s244 = sshll.u32 [#allocation7], 4
          %s245 = int_to_ptr.vmem [resolvable:$true] %s244
          %250 = dma.hbm_to_vmem [thread:$0]  %s6, 8192, %s245, [#allocation6], 256, 256, 16
        $region36: #{tpu_custom_call.1} parent=11 // pred_fallthru
          _
      $region12: #{tpu_custom_call.1} parent=5 // pred_fallthru
        _
      %p251 = scmp.lt.s32.totalorder %s20, 2
      // Predicated region
      $region37: #{tpu_custom_call.1} parent=5 // pred_check
        %p252 = pneg %p251
      $region38: #{tpu_custom_call.1} parent=5 // pred_check_branch
        %254 = sbr.rel (%p252) target = $region40
      $region39: #{tpu_custom_call.1} parent=5 // pred_region
        // Predicated region
        $region41: #{tpu_custom_call.1} parent=39 // pred_check
          %p255 = pneg %p40
        $region42: #{tpu_custom_call.1} parent=39 // pred_check_branch
          %257 = sbr.rel (%p255) target = $region44
        $region43: #{tpu_custom_call.1} parent=39 // pred_region
          %s258 = sand.u32 %s30, 1
          %s259 = scalar_lea.sflag [#allocation3], %s258
          %s260 = sand.u32 %s30, 1
          %s261 = smul.addr %s260, 64
          %s262 = scalar_lea.vmem [#allocation2], %s261
          %s264 = ssub.s32 1024, 1024
          %265 = vsyncadd %s259, %s264
          %s266 = smul.addr %s20, 8
          %s267 = smul.addr %s266, 128
          %s268 = scalar_lea.hbm %s0, %s267
          %s269 = sshll.u32 %s262, 4
          %s270 = int_to_ptr.vmem [resolvable:$true] %s269
          %275 = dma.hbm_to_vmem [thread:$0]  %s268, 1024, %s270, %s259, 256, 256, 16
        $region44: #{tpu_custom_call.1} parent=39 // pred_fallthru
          _
      $region40: #{tpu_custom_call.1} parent=5 // pred_fallthru
        _
      %p276 = scmp.le.s32.totalorder 1, %s20
      %p277 = scmp.lt.s32.totalorder %s20, 3
      %p278 = pnand %p276, %p277
      %p279 = pneg %p278
      // Predicated region
      $region45: #{tpu_custom_call.1} parent=5 // pred_check
        _
      $region46: #{tpu_custom_call.1} parent=5 // pred_check_branch
        %281 = sbr.rel (%p278) target = $region48
      $region47: #{tpu_custom_call.1} parent=5 // pred_region
        %s282 = ssub.s32 %s20, 1
        %s283 = sand.u32 %s33, 1
        %s284 = scalar_lea.sflag [#allocation3], %s283
        %s285 = sand.u32 %s33, 1
        %s286 = smul.addr %s285, 64
        %s287 = scalar_lea.vmem [#allocation2], %s286
        // Predicated region
        $region49: #{tpu_custom_call.1} parent=47 // pred_check
          %p288 = pneg %p46
        $region50: #{tpu_custom_call.1} parent=47 // pred_check_branch
          %290 = sbr.rel (%p288) target = $region52
        $region51: #{tpu_custom_call.1} parent=47 // pred_region
          %291 = dma.done %s284, 1024
        $region52: #{tpu_custom_call.1} parent=47 // pred_fallthru
          _
        // Predicated region
        $region53: #{tpu_custom_call.1} parent=47 // pred_check
          %p292 = pneg %p151
        $region54: #{tpu_custom_call.1} parent=47 // pred_check_branch
          %294 = sbr.rel (%p292) target = $region56
        $region55: #{tpu_custom_call.1} parent=47 // pred_region
          %295 = dma.done [#allocation6], 8192
        $region56: #{tpu_custom_call.1} parent=47 // pred_fallthru
          _
        // Predicated region
        $region57: #{tpu_custom_call.1} parent=47 // pred_check
          %p296 = pneg %p172
        $region58: #{tpu_custom_call.1} parent=47 // pred_check_branch
          %298 = sbr.rel (%p296) target = $region60
        $region59: #{tpu_custom_call.1} parent=47 // pred_region
          %299 = dma.done [#allocation6], 8192
        $region60: #{tpu_custom_call.1} parent=47 // pred_fallthru
          _
        %s300 = sand.u32 %s33, 1
        %s301 = scalar_lea.sflag [#allocation3], %s300
        %s302 = sand.u32 %s33, 1
        %s303 = smul.addr %s302, 64
        %s304 = scalar_lea.vmem [#allocation2], %s303
        %p305 = pneg %p46
        %p306 = pneg %p43
        %p307 = pneg %p67
        %p308 = pneg %p64
        %p309 = pneg %p88
        %p310 = pneg %p85
        %p311 = pneg %p109
        %p312 = pneg %p106
        %p313 = pneg %p130
        %p314 = pneg %p127
        %p315 = pneg %p151
        %p316 = pneg %p148
        %p317 = pneg %p172
        %p318 = pneg %p169
        %p319 = pneg %p198
        %p320 = pneg %p195
        %s321 = sand.u32 %s185, 1
        %s322 = scalar_lea.sflag [#allocation4], %s321
        %s323 = sand.u32 %s185, 1
        %s324 = smul.addr %s323, 64
        %s325 = scalar_lea.vmem [#allocation8], %s324
        %v326 = vld [vmem:[%s287] sm:$0xff]
        %v327 = vld [vmem:[%s287 + $0x8] sm:$0xff]
        %v328 = vld [vmem:[%s287 + $0x10] sm:$0xff]
        %v329 = vld [vmem:[%s287 + $0x18] sm:$0xff]
        %v330 = vld [vmem:[%s287 + $0x20] sm:$0xff]
        %v331 = vld [vmem:[%s287 + $0x28] sm:$0xff]
        %v332 = vld [vmem:[%s287 + $0x30] sm:$0xff]
        %v333 = vld [vmem:[%s287 + $0x38] sm:$0xff]
        %334 = vmatprep.subr.mxu0 0.0
        %335 = vmatpush1.msra.mxu0 0.00390625
        %336 = vmatprep.subr.mxu0 0.0
        %337 = vmatpush1.msra.mxu0 0.00390625
        %338 = vmatprep.subr.mxu0 0.0
        %339 = vmatpush1.msra.mxu0 0.00390625
        %340 = vmatprep.subr.mxu0 0.0
        %341 = vmatpush1.msra.mxu0 0.00390625
        %342 = vmatprep.subr.mxu0 0.0
        %343 = vmatpush1.msra.mxu0 0.00390625
        %344 = vmatprep.subr.mxu0 0.0
        %345 = vmatpush1.msra.mxu0 0.00390625
        %346 = vmatprep.subr.mxu0 0.0
        %347 = vmatpush1.msra.mxu0 0.00390625
        %348 = vmatprep.subr.mxu0 0.0
        %349 = vmatpush1.msra.mxu0 0.00390625
        %350 = vmatprep.subr.mxu0 0.0
        %351 = vmatpush1.msra.mxu0 0.00390625
        %352 = vmatprep.subr.mxu0 0.0
        %353 = vmatpush1.msra.mxu0 0.00390625
        %354 = vmatprep.subr.mxu0 0.0
        %355 = vmatpush1.msra.mxu0 0.00390625
        %356 = vmatprep.subr.mxu0 0.0
        %357 = vmatpush1.msra.mxu0 0.00390625
        %358 = vmatprep.subr.mxu0 0.0
        %359 = vmatpush1.msra.mxu0 0.00390625
        %360 = vmatprep.subr.mxu0 0.0
        %361 = vmatpush1.msra.mxu0 0.00390625
        %362 = vmatprep.subr.mxu0 0.0
        %363 = vmatpush1.msra.mxu0 0.00390625
        %364 = vmatprep.subr.mxu0 0.0
        %365 = vmatpush1.msra.mxu0 0.00390625
        %366 = vmatprep.subr.mxu0 0.0
        %367 = vmatpush1.msra.mxu0 0.00390625
        %368 = vmatprep.subr.mxu0 0.0
        %369 = vmatpush1.msra.mxu0 0.00390625
        %370 = vmatprep.subr.mxu0 0.0
        %371 = vmatpush1.msra.mxu0 0.00390625
        %372 = vmatprep.subr.mxu0 0.0
        %373 = vmatpush1.msra.mxu0 0.00390625
        %374 = vmatprep.subr.mxu0 0.0
        %375 = vmatpush1.msra.mxu0 0.00390625
        %376 = vmatprep.subr.mxu0 0.0
        %377 = vmatpush1.msra.mxu0 0.00390625
        %378 = vmatprep.subr.mxu0 0.0
        %379 = vmatpush1.msra.mxu0 0.00390625
        %380 = vmatprep.subr.mxu0 0.0
        %381 = vmatpush1.msra.mxu0 0.00390625
        %382 = vmatprep.subr.mxu0 0.0
        %383 = vmatpush1.msra.mxu0 0.00390625
        %384 = vmatprep.subr.mxu0 0.0
        %385 = vmatpush1.msra.mxu0 0.00390625
        %386 = vmatprep.subr.mxu0 0.0
        %387 = vmatpush1.msra.mxu0 0.00390625
        %388 = vmatprep.subr.mxu0 0.0
        %389 = vmatpush1.msra.mxu0 0.00390625
        %390 = vmatprep.subr.mxu0 0.0
        %391 = vmatpush1.msra.mxu0 0.00390625
        %392 = vmatprep.subr.mxu0 0.0
        %393 = vmatpush1.msra.mxu0 0.00390625
        %394 = vmatprep.subr.mxu0 0.0
        %395 = vmatpush1.msra.mxu0 0.00390625
        %396 = vmatprep.subr.mxu0 0.0
        %397 = vmatpush1.msra.mxu0 0.00390625
        %398 = vmatprep.mubr.f32.mxu0 %v327
        %399 = vmatmul.mubr.f32.gmra.mrb[0].mxu0 %v326
        %v400 = vpop.f32.mrb[0].mxu0
        %v401 = vadd.f32 0.0, %v400
        %v402 = vpop.f32.mrb[0].mxu0
        %403 = vmatprep.mubr.f32.mxu0 %v329
        %404 = vmatmul.mubr.f32.gmra.mrb[0].mxu0 %v328
        %v405 = vpop.f32.mrb[0].mxu0
        %v406 = vadd.f32 0.0, %v405
        %v407 = vpop.f32.mrb[0].mxu0
        %408 = vmatprep.mubr.f32.mxu0 %v331
        %409 = vmatmul.mubr.f32.gmra.mrb[0].mxu0 %v330
        %v410 = vpop.f32.mrb[0].mxu0
        %v411 = vadd.f32 0.0, %v410
        %v412 = vpop.f32.mrb[0].mxu0
        %413 = vmatprep.mubr.f32.mxu0 %v333
        %414 = vmatmul.mubr.f32.gmra.mrb[0].mxu0 %v332
        %v415 = vpop.f32.mrb[0].mxu0
        %v416 = vadd.f32 0.0, %v415
        %v417 = vpop.f32.mrb[0].mxu0
        %418 = vdwg.mxu0
        %v419 = vmax.f32 %v326, %v327
        %420 = vmax.xlane.f32.xlu0 %v419
        %v421 = vpop.xlane.xlu0 %420
        %v422 = vmax.f32 %v328, %v329
        %423 = vmax.xlane.f32.xlu0 %v422
        %v424 = vpop.xlane.xlu0 %423
        %v425 = vmax.f32 %v330, %v331
        %426 = vmax.xlane.f32.xlu0 %v425
        %v427 = vpop.xlane.xlu0 %426
        %v428 = vmax.f32 %v332, %v333
        %429 = vmax.xlane.f32.xlu0 %v428
        %v430 = vpop.xlane.xlu0 %429
        %vm431 = vcmask 7168
        %v432 = vsel %vm431, %v401, %v421
        %v433 = vsel %vm431, %v406, %v424
        %v434 = vsel %vm431, %v411, %v427
        %v435 = vsel %vm431, %v416, %v430
        %v436 = vld [vmem:[%s1] sm:$0x3]
        %v437 = vld [vmem:[%s2] sm:$0x3]
        %439 = vset.pattern.permute.xlu0 0
        %440 = vperm.xlu0 %439, %v437
        %v441 = vpop.permute.xlu0 %440
        %vm443 = vcmask 261120
        %v445 = vsel %vm443, %v436, 0
        %447 = vmatprep.subr.mxu0 0.0
        %448 = vmatpush1.msra.mxu0 %v432
        %449 = vmatprep.subr.mxu0 0.0
        %450 = vmatpush1.msra.mxu0 %v433
        %451 = vmatprep.subr.mxu0 0.0
        %452 = vmatpush1.msra.mxu0 %v434
        %453 = vmatprep.subr.mxu0 0.0
        %454 = vmatpush1.msra.mxu0 %v435
        %455 = vmatprep.subr.mxu0 0.0
        %456 = vmatpush1.msra.mxu0 0.0
        %457 = vmatprep.subr.mxu0 0.0
        %458 = vmatpush1.msra.mxu0 0.0
        %459 = vmatprep.subr.mxu0 0.0
        %460 = vmatpush1.msra.mxu0 0.0
        %461 = vmatprep.subr.mxu0 0.0
        %462 = vmatpush1.msra.mxu0 0.0
        %463 = vmatprep.subr.mxu0 0.0
        %464 = vmatpush1.msra.mxu0 0.0
        %465 = vmatprep.subr.mxu0 0.0
        %466 = vmatpush1.msra.mxu0 0.0
        %467 = vmatprep.subr.mxu0 0.0
        %468 = vmatpush1.msra.mxu0 0.0
        %469 = vmatprep.subr.mxu0 0.0
        %470 = vmatpush1.msra.mxu0 0.0
        %471 = vmatprep.subr.mxu0 0.0
        %472 = vmatpush1.msra.mxu0 0.0
        %473 = vmatprep.subr.mxu0 0.0
        %474 = vmatpush1.msra.mxu0 0.0
        %475 = vmatprep.subr.mxu0 0.0
        %476 = vmatpush1.msra.mxu0 0.0
        %477 = vmatprep.subr.mxu0 0.0
        %478 = vmatpush1.msra.mxu0 0.0
        %479 = vmatprep.subr.mxu0 0.0
        %480 = vmatpush1.msra.mxu0 0.0
        %481 = vmatprep.subr.mxu0 0.0
        %482 = vmatpush1.msra.mxu0 0.0
        %483 = vmatprep.subr.mxu0 0.0
        %484 = vmatpush1.msra.mxu0 0.0
        %485 = vmatprep.subr.mxu0 0.0
        %486 = vmatpush1.msra.mxu0 0.0
        %487 = vmatprep.subr.mxu0 0.0
        %488 = vmatpush1.msra.mxu0 0.0
        %489 = vmatprep.subr.mxu0 0.0
        %490 = vmatpush1.msra.mxu0 0.0
        %491 = vmatprep.subr.mxu0 0.0
        %492 = vmatpush1.msra.mxu0 0.0
        %493 = vmatprep.subr.mxu0 0.0
        %494 = vmatpush1.msra.mxu0 0.0
        %495 = vmatprep.subr.mxu0 0.0
        %496 = vmatpush1.msra.mxu0 0.0
        %497 = vmatprep.subr.mxu0 0.0
        %498 = vmatpush1.msra.mxu0 0.0
        %499 = vmatprep.subr.mxu0 0.0
        %500 = vmatpush1.msra.mxu0 0.0
        %501 = vmatprep.subr.mxu0 0.0
        %502 = vmatpush1.msra.mxu0 0.0
        %503 = vmatprep.subr.mxu0 0.0
        %504 = vmatpush1.msra.mxu0 0.0
        %505 = vmatprep.subr.mxu0 0.0
        %506 = vmatpush1.msra.mxu0 0.0
        %507 = vmatprep.subr.mxu0 0.0
        %508 = vmatpush1.msra.mxu0 0.0
        %509 = vmatprep.subr.mxu0 0.0
        %510 = vmatpush1.msra.mxu0 0.0
        %511 = vmatprep.mubr.f32.mxu0 0.0
        %512 = vmatmul.mubr.f32.gmra.mrb[0].mxu0 %v445
        %v513 = vpop.f32.mrb[0].mxu0
        %v514 = vadd.f32 %v441, %v513
        %v515 = vpop.f32.mrb[0].mxu0
        %516 = vdwg.mxu0
        %v517 = vmax.f32 %v514, 0.0
        %vm518 = vcmask 9216
        %v519 = vsel %vm518, %v517, 0.0
        %520 = vadd.xlane.f32.xlu0 %v519
        %v521 = vpop.xlane.xlu0 %520
        %v522 = vld [vmem:[%s3] sm:$0xff]
        %v523 = vld [vmem:[%s3 + $0x8] sm:$0xff]
        %v524 = vld [vmem:[%s3 + $0x10] sm:$0xff]
        %v525 = vld [vmem:[%s3 + $0x18] sm:$0xff]
        %v526 = vld [vmem:[%s4] sm:$0xff]
        %v527 = vld [vmem:[%s4 + $0x8] sm:$0xff]
        %v528 = vld [vmem:[%s4 + $0x10] sm:$0xff]
        %v529 = vld [vmem:[%s4 + $0x18] sm:$0xff]
        %v530 = vmul.f32 %v526, 2.0
        %v531 = vmul.f32 %v527, 2.0
        %v532 = vmul.f32 %v528, 2.0
        %v533 = vmul.f32 %v529, 2.0
        %vm534 = vcmask 15360
        %v536 = vsel %vm534, %v522, 0
        %v539 = vsel %vm534, %v523, 0
        %v542 = vsel %vm534, %v524, 0
        %v545 = vsel %vm534, %v525, 0
        %vm547 = vcmask 1041408
        %v549 = vsel %vm547, %v521, 0
        %551 = vmatprep.subr.mxu0 0.0
        %552 = vmatpush1.msra.mxu0 %v549
        %553 = vmatprep.subr.mxu0 0.0
        %554 = vmatpush1.msra.mxu0 0.0
        %555 = vmatprep.subr.mxu0 0.0
        %556 = vmatpush1.msra.mxu0 0.0
        %557 = vmatprep.subr.mxu0 0.0
        %558 = vmatpush1.msra.mxu0 0.0
        %559 = vmatprep.subr.mxu0 0.0
        %560 = vmatpush1.msra.mxu0 0.0
        %561 = vmatprep.subr.mxu0 0.0
        %562 = vmatpush1.msra.mxu0 0.0
        %563 = vmatprep.subr.mxu0 0.0
        %564 = vmatpush1.msra.mxu0 0.0
        %565 = vmatprep.subr.mxu0 0.0
        %566 = vmatpush1.msra.mxu0 0.0
        %567 = vmatprep.subr.mxu0 0.0
        %568 = vmatpush1.msra.mxu0 0.0
        %569 = vmatprep.subr.mxu0 0.0
        %570 = vmatpush1.msra.mxu0 0.0
        %571 = vmatprep.subr.mxu0 0.0
        %572 = vmatpush1.msra.mxu0 0.0
        %573 = vmatprep.subr.mxu0 0.0
        %574 = vmatpush1.msra.mxu0 0.0
        %575 = vmatprep.subr.mxu0 0.0
        %576 = vmatpush1.msra.mxu0 0.0
        %577 = vmatprep.subr.mxu0 0.0
        %578 = vmatpush1.msra.mxu0 0.0
        %579 = vmatprep.subr.mxu0 0.0
        %580 = vmatpush1.msra.mxu0 0.0
        %581 = vmatprep.subr.mxu0 0.0
        %582 = vmatpush1.msra.mxu0 0.0
        %583 = vmatprep.subr.mxu0 0.0
        %584 = vmatpush1.msra.mxu0 0.0
        %585 = vmatprep.subr.mxu0 0.0
        %586 = vmatpush1.msra.mxu0 0.0
        %587 = vmatprep.subr.mxu0 0.0
        %588 = vmatpush1.msra.mxu0 0.0
        %589 = vmatprep.subr.mxu0 0.0
        %590 = vmatpush1.msra.mxu0 0.0
        %591 = vmatprep.subr.mxu0 0.0
        %592 = vmatpush1.msra.mxu0 0.0
        %593 = vmatprep.subr.mxu0 0.0
        %594 = vmatpush1.msra.mxu0 0.0
        %595 = vmatprep.subr.mxu0 0.0
        %596 = vmatpush1.msra.mxu0 0.0
        %597 = vmatprep.subr.mxu0 0.0
        %598 = vmatpush1.msra.mxu0 0.0
        %599 = vmatprep.subr.mxu0 0.0
        %600 = vmatpush1.msra.mxu0 0.0
        %601 = vmatprep.subr.mxu0 0.0
        %602 = vmatpush1.msra.mxu0 0.0
        %603 = vmatprep.subr.mxu0 0.0
        %604 = vmatpush1.msra.mxu0 0.0
        %605 = vmatprep.subr.mxu0 0.0
        %606 = vmatpush1.msra.mxu0 0.0
        %607 = vmatprep.subr.mxu0 0.0
        %608 = vmatpush1.msra.mxu0 0.0
        %609 = vmatprep.subr.mxu0 0.0
        %610 = vmatpush1.msra.mxu0 0.0
        %611 = vmatprep.subr.mxu0 0.0
        %612 = vmatpush1.msra.mxu0 0.0
        %613 = vmatprep.subr.mxu0 0.0
        %614 = vmatpush1.msra.mxu0 0.0
        %615 = vmatprep.mubr.f32.mxu0 0.0
        %616 = vmatmul.mubr.f32.gmra.mrb[0].mxu0 %v536
        %v617 = vpop.f32.mrb[0].mxu0
        %v618 = vadd.f32 %v530, %v617
        %v619 = vpop.f32.mrb[0].mxu0
        %620 = vmatprep.mubr.f32.mxu0 0.0
        %621 = vmatmul.mubr.f32.gmra.mrb[0].mxu0 %v539
        %v622 = vpop.f32.mrb[0].mxu0
        %v623 = vadd.f32 %v531, %v622
        %v624 = vpop.f32.mrb[0].mxu0
        %625 = vmatprep.mubr.f32.mxu0 0.0
        %626 = vmatmul.mubr.f32.gmra.mrb[0].mxu0 %v542
        %v627 = vpop.f32.mrb[0].mxu0
        %v628 = vadd.f32 %v532, %v627
        %v629 = vpop.f32.mrb[0].mxu0
        %630 = vmatprep.mubr.f32.mxu0 0.0
        %631 = vmatmul.mubr.f32.gmra.mrb[0].mxu0 %v545
        %v632 = vpop.f32.mrb[0].mxu0
        %v633 = vadd.f32 %v533, %v632
        %v634 = vpop.f32.mrb[0].mxu0
        %635 = vdwg.mxu0
        %v636 = vxor.u32 %v618, 2147483648
        %v637 = vxor.u32 %v623, 2147483648
        %v638 = vxor.u32 %v628, 2147483648
        %v639 = vxor.u32 %v633, 2147483648
        %v640 = vmul.f32 %v636, 1.442695
        %v641 = vpow.pop %v640
        %v642 = vmul.f32 %v637, 1.442695
        %v643 = vpow.pop %v642
        %v644 = vmul.f32 %v638, 1.442695
        %v645 = vpow.pop %v644
        %v646 = vmul.f32 %v639, 1.442695
        %v647 = vpow.pop %v646
        %v648 = vadd.f32 %v641, 1.0
        %v649 = vadd.f32 %v643, 1.0
        %v650 = vadd.f32 %v645, 1.0
        %v651 = vadd.f32 %v647, 1.0
        %v652 = vrcp.pop %v648
        %v653 = vmul.f32 1.0, %v652
        %v654 = vrcp.pop %v649
        %v655 = vmul.f32 1.0, %v654
        %v656 = vrcp.pop %v650
        %v657 = vmul.f32 1.0, %v656
        %v658 = vrcp.pop %v651
        %v659 = vmul.f32 1.0, %v658
        %661 = vset.pattern.permute.xlu0 0
        %662 = vperm.xlu0 %661, %v653
        %v663 = vpop.permute.xlu0 %662
        %666 = vset.pattern.permute.xlu0 0
        %667 = vperm.xlu0 %666, %v655
        %v668 = vpop.permute.xlu0 %667
        %671 = vset.pattern.permute.xlu0 0
        %672 = vperm.xlu0 %671, %v657
        %v673 = vpop.permute.xlu0 %672
        %676 = vset.pattern.permute.xlu0 0
        %677 = vperm.xlu0 %676, %v659
        %v678 = vpop.permute.xlu0 %677
        %v680 = vmul.f32 %v326, %v663
        %v681 = vmul.f32 %v327, %v663
        %v682 = vmul.f32 %v328, %v668
        %v683 = vmul.f32 %v329, %v668
        %v684 = vmul.f32 %v330, %v673
        %v685 = vmul.f32 %v331, %v673
        %v686 = vmul.f32 %v332, %v678
        %v687 = vmul.f32 %v333, %v678
        %v689 = vsel %vm443, 0.03125, 0
        %691 = vmatprep.subr.mxu0 %v681
        %692 = vmatpush1.msra.mxu0 %v680
        %693 = vmatprep.subr.mxu0 %v683
        %694 = vmatpush1.msra.mxu0 %v682
        %695 = vmatprep.subr.mxu0 %v685
        %696 = vmatpush1.msra.mxu0 %v684
        %697 = vmatprep.subr.mxu0 %v687
        %698 = vmatpush1.msra.mxu0 %v686
        %699 = vmatprep.subr.mxu0 0.0
        %700 = vmatpush1.msra.mxu0 0.0
        %701 = vmatprep.subr.mxu0 0.0
        %702 = vmatpush1.msra.mxu0 0.0
        %703 = vmatprep.subr.mxu0 0.0
        %704 = vmatpush1.msra.mxu0 0.0
        %705 = vmatprep.subr.mxu0 0.0
        %706 = vmatpush1.msra.mxu0 0.0
        %707 = vmatprep.subr.mxu0 0.0
        %708 = vmatpush1.msra.mxu0 0.0
        %709 = vmatprep.subr.mxu0 0.0
        %710 = vmatpush1.msra.mxu0 0.0
        %711 = vmatprep.subr.mxu0 0.0
        %712 = vmatpush1.msra.mxu0 0.0
        %713 = vmatprep.subr.mxu0 0.0
        %714 = vmatpush1.msra.mxu0 0.0
        %715 = vmatprep.subr.mxu0 0.0
        %716 = vmatpush1.msra.mxu0 0.0
        %717 = vmatprep.subr.mxu0 0.0
        %718 = vmatpush1.msra.mxu0 0.0
        %719 = vmatprep.subr.mxu0 0.0
        %720 = vmatpush1.msra.mxu0 0.0
        %721 = vmatprep.subr.mxu0 0.0
        %722 = vmatpush1.msra.mxu0 0.0
        %723 = vmatprep.subr.mxu0 0.0
        %724 = vmatpush1.msra.mxu0 0.0
        %725 = vmatprep.subr.mxu0 0.0
        %726 = vmatpush1.msra.mxu0 0.0
        %727 = vmatprep.subr.mxu0 0.0
        %728 = vmatpush1.msra.mxu0 0.0
        %729 = vmatprep.subr.mxu0 0.0
        %730 = vmatpush1.msra.mxu0 0.0
        %731 = vmatprep.subr.mxu0 0.0
        %732 = vmatpush1.msra.mxu0 0.0
        %733 = vmatprep.subr.mxu0 0.0
        %734 = vmatpush1.msra.mxu0 0.0
        %735 = vmatprep.subr.mxu0 0.0
        %736 = vmatpush1.msra.mxu0 0.0
        %737 = vmatprep.subr.mxu0 0.0
        %738 = vmatpush1.msra.mxu0 0.0
        %739 = vmatprep.subr.mxu0 0.0
        %740 = vmatpush1.msra.mxu0 0.0
        %741 = vmatprep.subr.mxu0 0.0
        %742 = vmatpush1.msra.mxu0 0.0
        %743 = vmatprep.subr.mxu0 0.0
        %744 = vmatpush1.msra.mxu0 0.0
        %745 = vmatprep.subr.mxu0 0.0
        %746 = vmatpush1.msra.mxu0 0.0
        %747 = vmatprep.subr.mxu0 0.0
        %748 = vmatpush1.msra.mxu0 0.0
        %749 = vmatprep.subr.mxu0 0.0
        %750 = vmatpush1.msra.mxu0 0.0
        %751 = vmatprep.subr.mxu0 0.0
        %752 = vmatpush1.msra.mxu0 0.0
        %753 = vmatprep.subr.mxu0 0.0
        %754 = vmatpush1.msra.mxu0 0.0
        %755 = vmatprep.mubr.f32.mxu0 0.0
        %756 = vmatmul.mubr.f32.gmra.mrb[0].mxu0 %v689
        %v757 = vpop.f32.mrb[0].mxu0
        %v758 = vadd.f32 0.0, %v757
        %v759 = vpop.f32.mrb[0].mxu0
        %v760 = vadd.f32 0.0, %v759
        %761 = vdwg.mxu0
        %v762 = vmax.f32 %v680, %v684
        %v763 = vmax.f32 %v682, %v686
        %v764 = vmax.f32 %v762, %v763
        %v765 = vrot.slane %v764, 4
        %v766 = vmax.f32 %v764, %v765
        %v767 = vrot.slane %v766, 2
        %v768 = vmax.f32 %v766, %v767
        %v769 = vrot.slane %v768, 1
        %v770 = vmax.f32 %v768, %v769
        %v771 = vmax.f32 %v681, %v685
        %v772 = vmax.f32 %v683, %v687
        %v773 = vmax.f32 %v771, %v772
        %v774 = vrot.slane %v773, 4
        %v775 = vmax.f32 %v773, %v774
        %v776 = vrot.slane %v775, 2
        %v777 = vmax.f32 %v775, %v776
        %v778 = vrot.slane %v777, 1
        %v779 = vmax.f32 %v777, %v778
        %v780 = vld [vmem:[#allocation5] sm:$0xff]
        %v781 = vld [vmem:[#allocation5 + $0x8] sm:$0xff]
        %v782 = vld [vmem:[#allocation5 + $0x10] sm:$0xff]
        %v783 = vld [vmem:[#allocation5 + $0x18] sm:$0xff]
        %v784 = vld [vmem:[#allocation5 + $0x20] sm:$0xff]
        %v785 = vld [vmem:[#allocation5 + $0x28] sm:$0xff]
        %v786 = vld [vmem:[#allocation5 + $0x30] sm:$0xff]
        %v787 = vld [vmem:[#allocation5 + $0x38] sm:$0xff]
        %v788 = vld [vmem:[#allocation5 + $0x40] sm:$0xff]
        %v789 = vld [vmem:[#allocation5 + $0x48] sm:$0xff]
        %v790 = vld [vmem:[#allocation5 + $0x50] sm:$0xff]
        %v791 = vld [vmem:[#allocation5 + $0x58] sm:$0xff]
        %v792 = vld [vmem:[#allocation5 + $0x60] sm:$0xff]
        %v793 = vld [vmem:[#allocation5 + $0x68] sm:$0xff]
        %v794 = vld [vmem:[#allocation5 + $0x70] sm:$0xff]
        %v795 = vld [vmem:[#allocation5 + $0x78] sm:$0xff]
        %v796 = vld [vmem:[#allocation5 + $0x80] sm:$0xff]
        %v797 = vld [vmem:[#allocation5 + $0x88] sm:$0xff]
        %v798 = vld [vmem:[#allocation5 + $0x90] sm:$0xff]
        %v799 = vld [vmem:[#allocation5 + $0x98] sm:$0xff]
        %v800 = vld [vmem:[#allocation5 + $0xa0] sm:$0xff]
        %v801 = vld [vmem:[#allocation5 + $0xa8] sm:$0xff]
        %v802 = vld [vmem:[#allocation5 + $0xb0] sm:$0xff]
        %v803 = vld [vmem:[#allocation5 + $0xb8] sm:$0xff]
        %v804 = vld [vmem:[#allocation5 + $0xc0] sm:$0xff]
        %v805 = vld [vmem:[#allocation5 + $0xc8] sm:$0xff]
        %v806 = vld [vmem:[#allocation5 + $0xd0] sm:$0xff]
        %v807 = vld [vmem:[#allocation5 + $0xd8] sm:$0xff]
        %v808 = vld [vmem:[#allocation5 + $0xe0] sm:$0xff]
        %v809 = vld [vmem:[#allocation5 + $0xe8] sm:$0xff]
        %v810 = vld [vmem:[#allocation5 + $0xf0] sm:$0xff]
        %v811 = vld [vmem:[#allocation5 + $0xf8] sm:$0xff]
        %v812 = vld [vmem:[#allocation5 + $0x100] sm:$0xff]
        %v813 = vld [vmem:[#allocation5 + $0x108] sm:$0xff]
        %v814 = vld [vmem:[#allocation5 + $0x110] sm:$0xff]
        %v815 = vld [vmem:[#allocation5 + $0x118] sm:$0xff]
        %v816 = vld [vmem:[#allocation5 + $0x120] sm:$0xff]
        %v817 = vld [vmem:[#allocation5 + $0x128] sm:$0xff]
        %v818 = vld [vmem:[#allocation5 + $0x130] sm:$0xff]
        %v819 = vld [vmem:[#allocation5 + $0x138] sm:$0xff]
        %v820 = vld [vmem:[#allocation5 + $0x140] sm:$0xff]
        %v821 = vld [vmem:[#allocation5 + $0x148] sm:$0xff]
        %v822 = vld [vmem:[#allocation5 + $0x150] sm:$0xff]
        %v823 = vld [vmem:[#allocation5 + $0x158] sm:$0xff]
        %v824 = vld [vmem:[#allocation5 + $0x160] sm:$0xff]
        %v825 = vld [vmem:[#allocation5 + $0x168] sm:$0xff]
        %v826 = vld [vmem:[#allocation5 + $0x170] sm:$0xff]
        %v827 = vld [vmem:[#allocation5 + $0x178] sm:$0xff]
        %v828 = vld [vmem:[#allocation5 + $0x180] sm:$0xff]
        %v829 = vld [vmem:[#allocation5 + $0x188] sm:$0xff]
        %v830 = vld [vmem:[#allocation5 + $0x190] sm:$0xff]
        %v831 = vld [vmem:[#allocation5 + $0x198] sm:$0xff]
        %v832 = vld [vmem:[#allocation5 + $0x1a0] sm:$0xff]
        %v833 = vld [vmem:[#allocation5 + $0x1a8] sm:$0xff]
        %v834 = vld [vmem:[#allocation5 + $0x1b0] sm:$0xff]
        %v835 = vld [vmem:[#allocation5 + $0x1b8] sm:$0xff]
        %v836 = vld [vmem:[#allocation5 + $0x1c0] sm:$0xff]
        %v837 = vld [vmem:[#allocation5 + $0x1c8] sm:$0xff]
        %v838 = vld [vmem:[#allocation5 + $0x1d0] sm:$0xff]
        %v839 = vld [vmem:[#allocation5 + $0x1d8] sm:$0xff]
        %v840 = vld [vmem:[#allocation5 + $0x1e0] sm:$0xff]
        %v841 = vld [vmem:[#allocation5 + $0x1e8] sm:$0xff]
        %v842 = vld [vmem:[#allocation5 + $0x1f0] sm:$0xff]
        %v843 = vld [vmem:[#allocation5 + $0x1f8] sm:$0xff]
        %v844 = vld [vmem:[#allocation7] sm:$0xff]
        %v845 = vld [vmem:[#allocation7 + $0x8] sm:$0xff]
        %v846 = vld [vmem:[#allocation7 + $0x10] sm:$0xff]
        %v847 = vld [vmem:[#allocation7 + $0x18] sm:$0xff]
        %v848 = vld [vmem:[#allocation7 + $0x20] sm:$0xff]
        %v849 = vld [vmem:[#allocation7 + $0x28] sm:$0xff]
        %v850 = vld [vmem:[#allocation7 + $0x30] sm:$0xff]
        %v851 = vld [vmem:[#allocation7 + $0x38] sm:$0xff]
        %v852 = vld [vmem:[#allocation7 + $0x40] sm:$0xff]
        %v853 = vld [vmem:[#allocation7 + $0x48] sm:$0xff]
        %v854 = vld [vmem:[#allocation7 + $0x50] sm:$0xff]
        %v855 = vld [vmem:[#allocation7 + $0x58] sm:$0xff]
        %v856 = vld [vmem:[#allocation7 + $0x60] sm:$0xff]
        %v857 = vld [vmem:[#allocation7 + $0x68] sm:$0xff]
        %v858 = vld [vmem:[#allocation7 + $0x70] sm:$0xff]
        %v859 = vld [vmem:[#allocation7 + $0x78] sm:$0xff]
        %v860 = vld [vmem:[#allocation7 + $0x80] sm:$0xff]
        %v861 = vld [vmem:[#allocation7 + $0x88] sm:$0xff]
        %v862 = vld [vmem:[#allocation7 + $0x90] sm:$0xff]
        %v863 = vld [vmem:[#allocation7 + $0x98] sm:$0xff]
        %v864 = vld [vmem:[#allocation7 + $0xa0] sm:$0xff]
        %v865 = vld [vmem:[#allocation7 + $0xa8] sm:$0xff]
        %v866 = vld [vmem:[#allocation7 + $0xb0] sm:$0xff]
        %v867 = vld [vmem:[#allocation7 + $0xb8] sm:$0xff]
        %v868 = vld [vmem:[#allocation7 + $0xc0] sm:$0xff]
        %v869 = vld [vmem:[#allocation7 + $0xc8] sm:$0xff]
        %v870 = vld [vmem:[#allocation7 + $0xd0] sm:$0xff]
        %v871 = vld [vmem:[#allocation7 + $0xd8] sm:$0xff]
        %v872 = vld [vmem:[#allocation7 + $0xe0] sm:$0xff]
        %v873 = vld [vmem:[#allocation7 + $0xe8] sm:$0xff]
        %v874 = vld [vmem:[#allocation7 + $0xf0] sm:$0xff]
        %v875 = vld [vmem:[#allocation7 + $0xf8] sm:$0xff]
        %v876 = vld [vmem:[#allocation7 + $0x100] sm:$0xff]
        %v877 = vld [vmem:[#allocation7 + $0x108] sm:$0xff]
        %v878 = vld [vmem:[#allocation7 + $0x110] sm:$0xff]
        %v879 = vld [vmem:[#allocation7 + $0x118] sm:$0xff]
        %v880 = vld [vmem:[#allocation7 + $0x120] sm:$0xff]
        %v881 = vld [vmem:[#allocation7 + $0x128] sm:$0xff]
        %v882 = vld [vmem:[#allocation7 + $0x130] sm:$0xff]
        %v883 = vld [vmem:[#allocation7 + $0x138] sm:$0xff]
        %v884 = vld [vmem:[#allocation7 + $0x140] sm:$0xff]
        %v885 = vld [vmem:[#allocation7 + $0x148] sm:$0xff]
        %v886 = vld [vmem:[#allocation7 + $0x150] sm:$0xff]
        %v887 = vld [vmem:[#allocation7 + $0x158] sm:$0xff]
        %v888 = vld [vmem:[#allocation7 + $0x160] sm:$0xff]
        %v889 = vld [vmem:[#allocation7 + $0x168] sm:$0xff]
        %v890 = vld [vmem:[#allocation7 + $0x170] sm:$0xff]
        %v891 = vld [vmem:[#allocation7 + $0x178] sm:$0xff]
        %v892 = vld [vmem:[#allocation7 + $0x180] sm:$0xff]
        %v893 = vld [vmem:[#allocation7 + $0x188] sm:$0xff]
        %v894 = vld [vmem:[#allocation7 + $0x190] sm:$0xff]
        %v895 = vld [vmem:[#allocation7 + $0x198] sm:$0xff]
        %v896 = vld [vmem:[#allocation7 + $0x1a0] sm:$0xff]
        %v897 = vld [vmem:[#allocation7 + $0x1a8] sm:$0xff]
        %v898 = vld [vmem:[#allocation7 + $0x1b0] sm:$0xff]
        %v899 = vld [vmem:[#allocation7 + $0x1b8] sm:$0xff]
        %v900 = vld [vmem:[#allocation7 + $0x1c0] sm:$0xff]
        %v901 = vld [vmem:[#allocation7 + $0x1c8] sm:$0xff]
        %v902 = vld [vmem:[#allocation7 + $0x1d0] sm:$0xff]
        %v903 = vld [vmem:[#allocation7 + $0x1d8] sm:$0xff]
        %v904 = vld [vmem:[#allocation7 + $0x1e0] sm:$0xff]
        %v905 = vld [vmem:[#allocation7 + $0x1e8] sm:$0xff]
        %v906 = vld [vmem:[#allocation7 + $0x1f0] sm:$0xff]
        %v907 = vld [vmem:[#allocation7 + $0x1f8] sm:$0xff]
        %908 = vmatprep.subr.mxu0 %v845
        %909 = vmatpush1.msra.mxu0 %v844
        %910 = vmatprep.subr.mxu0 %v847
        %911 = vmatpush1.msra.mxu0 %v846
        %912 = vmatprep.subr.mxu0 %v849
        %913 = vmatpush1.msra.mxu0 %v848
        %914 = vmatprep.subr.mxu0 %v851
        %915 = vmatpush1.msra.mxu0 %v850
        %916 = vmatprep.subr.mxu0 %v853
        %917 = vmatpush1.msra.mxu0 %v852
        %918 = vmatprep.subr.mxu0 %v855
        %919 = vmatpush1.msra.mxu0 %v854
        %920 = vmatprep.subr.mxu0 %v857
        %921 = vmatpush1.msra.mxu0 %v856
        %922 = vmatprep.subr.mxu0 %v859
        %923 = vmatpush1.msra.mxu0 %v858
        %924 = vmatprep.subr.mxu0 %v861
        %925 = vmatpush1.msra.mxu0 %v860
        %926 = vmatprep.subr.mxu0 %v863
        %927 = vmatpush1.msra.mxu0 %v862
        %928 = vmatprep.subr.mxu0 %v865
        %929 = vmatpush1.msra.mxu0 %v864
        %930 = vmatprep.subr.mxu0 %v867
        %931 = vmatpush1.msra.mxu0 %v866
        %932 = vmatprep.subr.mxu0 %v869
        %933 = vmatpush1.msra.mxu0 %v868
        %934 = vmatprep.subr.mxu0 %v871
        %935 = vmatpush1.msra.mxu0 %v870
        %936 = vmatprep.subr.mxu0 %v873
        %937 = vmatpush1.msra.mxu0 %v872
        %938 = vmatprep.subr.mxu0 %v875
        %939 = vmatpush1.msra.mxu0 %v874
        %940 = vmatprep.subr.mxu0 %v877
        %941 = vmatpush1.msra.mxu0 %v876
        %942 = vmatprep.subr.mxu0 %v879
        %943 = vmatpush1.msra.mxu0 %v878
        %944 = vmatprep.subr.mxu0 %v881
        %945 = vmatpush1.msra.mxu0 %v880
        %946 = vmatprep.subr.mxu0 %v883
        %947 = vmatpush1.msra.mxu0 %v882
        %948 = vmatprep.subr.mxu0 %v885
        %949 = vmatpush1.msra.mxu0 %v884
        %950 = vmatprep.subr.mxu0 %v887
        %951 = vmatpush1.msra.mxu0 %v886
        %952 = vmatprep.subr.mxu0 %v889
        %953 = vmatpush1.msra.mxu0 %v888
        %954 = vmatprep.subr.mxu0 %v891
        %955 = vmatpush1.msra.mxu0 %v890
        %956 = vmatprep.subr.mxu0 %v893
        %957 = vmatpush1.msra.mxu0 %v892
        %958 = vmatprep.subr.mxu0 %v895
        %959 = vmatpush1.msra.mxu0 %v894
        %960 = vmatprep.subr.mxu0 %v897
        %961 = vmatpush1.msra.mxu0 %v896
        %962 = vmatprep.subr.mxu0 %v899
        %963 = vmatpush1.msra.mxu0 %v898
        %964 = vmatprep.subr.mxu0 %v901
        %965 = vmatpush1.msra.mxu0 %v900
        %966 = vmatprep.subr.mxu0 %v903
        %967 = vmatpush1.msra.mxu0 %v902
        %968 = vmatprep.subr.mxu0 %v905
        %969 = vmatpush1.msra.mxu0 %v904
        %970 = vmatprep.subr.mxu0 %v907
        %971 = vmatpush1.msra.mxu0 %v906
        %972 = vmatprep.mubr.f32.mxu0 %v779
        %973 = vmatmul.mubr.f32.gmra.mrb[0].mxu0 %v770
        %v974 = vpop.f32.mrb[0].mxu0
        %v975 = vadd.f32 0.0, %v974
        %v976 = vpop.f32.mrb[0].mxu0
        %v977 = vadd.f32 0.0, %v976
        %978 = vdwg.mxu0
        %979 = vmatprep.subr.mxu0 %v781
        %980 = vmatpush1.msra.mxu0 %v780
        %981 = vmatprep.subr.mxu0 %v783
        %982 = vmatpush1.msra.mxu0 %v782
        %983 = vmatprep.subr.mxu0 %v785
        %984 = vmatpush1.msra.mxu0 %v784
        %985 = vmatprep.subr.mxu0 %v787
        %986 = vmatpush1.msra.mxu0 %v786
        %987 = vmatprep.subr.mxu0 %v789
        %988 = vmatpush1.msra.mxu0 %v788
        %989 = vmatprep.subr.mxu0 %v791
        %990 = vmatpush1.msra.mxu0 %v790
        %991 = vmatprep.subr.mxu0 %v793
        %992 = vmatpush1.msra.mxu0 %v792
        %993 = vmatprep.subr.mxu0 %v795
        %994 = vmatpush1.msra.mxu0 %v794
        %995 = vmatprep.subr.mxu0 %v797
        %996 = vmatpush1.msra.mxu0 %v796
        %997 = vmatprep.subr.mxu0 %v799
        %998 = vmatpush1.msra.mxu0 %v798
        %999 = vmatprep.subr.mxu0 %v801
        %1000 = vmatpush1.msra.mxu0 %v800
        %1001 = vmatprep.subr.mxu0 %v803
        %1002 = vmatpush1.msra.mxu0 %v802
        %1003 = vmatprep.subr.mxu0 %v805
        %1004 = vmatpush1.msra.mxu0 %v804
        %1005 = vmatprep.subr.mxu0 %v807
        %1006 = vmatpush1.msra.mxu0 %v806
        %1007 = vmatprep.subr.mxu0 %v809
        %1008 = vmatpush1.msra.mxu0 %v808
        %1009 = vmatprep.subr.mxu0 %v811
        %1010 = vmatpush1.msra.mxu0 %v810
        %1011 = vmatprep.subr.mxu0 %v813
        %1012 = vmatpush1.msra.mxu0 %v812
        %1013 = vmatprep.subr.mxu0 %v815
        %1014 = vmatpush1.msra.mxu0 %v814
        %1015 = vmatprep.subr.mxu0 %v817
        %1016 = vmatpush1.msra.mxu0 %v816
        %1017 = vmatprep.subr.mxu0 %v819
        %1018 = vmatpush1.msra.mxu0 %v818
        %1019 = vmatprep.subr.mxu0 %v821
        %1020 = vmatpush1.msra.mxu0 %v820
        %1021 = vmatprep.subr.mxu0 %v823
        %1022 = vmatpush1.msra.mxu0 %v822
        %1023 = vmatprep.subr.mxu0 %v825
        %1024 = vmatpush1.msra.mxu0 %v824
        %1025 = vmatprep.subr.mxu0 %v827
        %1026 = vmatpush1.msra.mxu0 %v826
        %1027 = vmatprep.subr.mxu0 %v829
        %1028 = vmatpush1.msra.mxu0 %v828
        %1029 = vmatprep.subr.mxu0 %v831
        %1030 = vmatpush1.msra.mxu0 %v830
        %1031 = vmatprep.subr.mxu0 %v833
        %1032 = vmatpush1.msra.mxu0 %v832
        %1033 = vmatprep.subr.mxu0 %v835
        %1034 = vmatpush1.msra.mxu0 %v834
        %1035 = vmatprep.subr.mxu0 %v837
        %1036 = vmatpush1.msra.mxu0 %v836
        %1037 = vmatprep.subr.mxu0 %v839
        %1038 = vmatpush1.msra.mxu0 %v838
        %1039 = vmatprep.subr.mxu0 %v841
        %1040 = vmatpush1.msra.mxu0 %v840
        %1041 = vmatprep.subr.mxu0 %v843
        %1042 = vmatpush1.msra.mxu0 %v842
        %1043 = vmatprep.mubr.f32.mxu0 %v760
        %1044 = vmatmul.mubr.f32.gmra.mrb[0].mxu0 %v758
        %v1045 = vpop.f32.mrb[0].mxu0
        %v1046 = vadd.f32 %v975, %v1045
        %v1047 = vpop.f32.mrb[0].mxu0
        %v1048 = vadd.f32 %v977, %v1047
        %1049 = vdwg.mxu0
        %v1050 = vxor.u32 %v1046, 2147483648
        %v1051 = vxor.u32 %v1048, 2147483648
        %v1052 = vmul.f32 %v1050, 1.442695
        %v1053 = vpow.pop %v1052
        %v1054 = vmul.f32 %v1051, 1.442695
        %v1055 = vpow.pop %v1054
        %v1056 = vadd.f32 %v1053, 1.0
        %v1057 = vadd.f32 %v1055, 1.0
        %v1058 = vrcp.pop %v1056
        %v1059 = vmul.f32 1.0, %v1058
        %v1060 = vrcp.pop %v1057
        %v1061 = vmul.f32 1.0, %v1060
        %v1062 = vlaneseq
        %v1063 = vshrl.u32 %v1062, 7
        %v1064 = vsub.s32 0, %v1063
        %v1065 = vrot.slane %v1059, %v1064
        %v1066 = vlaneseq
        %v1067 = vshrl.u32 %v1066, 7
        %v1068 = vsub.s32 0, %v1067
        %v1069 = vrot.slane %v1061, %v1068
        %v1070 = vmul.f32 %v680, %v1065
        %v1071 = vmul.f32 %v681, %v1069
        %v1072 = vmul.f32 %v682, %v1065
        %v1073 = vmul.f32 %v683, %v1069
        %v1074 = vmul.f32 %v684, %v1065
        %v1075 = vmul.f32 %v685, %v1069
        %v1076 = vmul.f32 %v686, %v1065
        %v1077 = vmul.f32 %v687, %v1069
        %v1078 = vmax.f32 %v1070, 0.0
        %v1079 = vmax.f32 %v1071, 0.0
        %v1080 = vmax.f32 %v1072, 0.0
        %v1081 = vmax.f32 %v1073, 0.0
        %v1082 = vmax.f32 %v1074, 0.0
        %v1083 = vmax.f32 %v1075, 0.0
        %v1084 = vmax.f32 %v1076, 0.0
        %v1085 = vmax.f32 %v1077, 0.0
        %1086 = vst [vmem:[%s325] sm:$0xff] %v1078
        %1087 = vst [vmem:[%s325 + $0x8] sm:$0xff] %v1079
        %1088 = vst [vmem:[%s325 + $0x10] sm:$0xff] %v1080
        %1089 = vst [vmem:[%s325 + $0x18] sm:$0xff] %v1081
        %1090 = vst [vmem:[%s325 + $0x20] sm:$0xff] %v1082
        %1091 = vst [vmem:[%s325 + $0x28] sm:$0xff] %v1083
        %1092 = vst [vmem:[%s325 + $0x30] sm:$0xff] %v1084
        %1093 = vst [vmem:[%s325 + $0x38] sm:$0xff] %v1085
        %s1094 = sand.u32 %s185, 1
        %s1095 = scalar_lea.sflag [#allocation4], %s1094
        %s1096 = sand.u32 %s185, 1
        %s1097 = smul.addr %s1096, 64
        %s1098 = scalar_lea.vmem [#allocation8], %s1097
        // Predicated region
        $region61: #{tpu_custom_call.1} parent=47 // pred_check
          %p1099 = pneg %p195
        $region62: #{tpu_custom_call.1} parent=47 // pred_check_branch
          %1101 = sbr.rel (%p1099) target = $region64
        $region63: #{tpu_custom_call.1} parent=47 // pred_region
          %s1103 = ssub.s32 1024, 1024
          %1104 = vsyncadd %s1095, %s1103
          %s1105 = smul.addr %s25, 8
          %s1106 = smul.addr %s1105, 128
          %s1107 = scalar_lea.hbm %s7, %s1106
          %s1108 = sshll.u32 %s1098, 4
          %s1109 = int_to_ptr.vmem [resolvable:$true] %s1108
          %1114 = dma.vmem_to_hbm [thread:$0]  %s1109, 1024, %s1107, %s1095, 256, 256, 16
        $region64: #{tpu_custom_call.1} parent=47 // pred_fallthru
          _
      $region48: #{tpu_custom_call.1} parent=5 // pred_fallthru
        _
      %p1115 = scmp.le.s32.totalorder 2, %s20
      // Predicated region
      $region65: #{tpu_custom_call.1} parent=5 // pred_check
        %p1116 = pneg %p1115
      $region66: #{tpu_custom_call.1} parent=5 // pred_check_branch
        %1118 = sbr.rel (%p1116) target = $region68
      $region67: #{tpu_custom_call.1} parent=5 // pred_region
        %s1119 = ssub.s32 %s20, 2
        // Predicated region
        $region69: #{tpu_custom_call.1} parent=67 // pred_check
          %p1120 = pneg %p201
        $region70: #{tpu_custom_call.1} parent=67 // pred_check_branch
          %1122 = sbr.rel (%p1120) target = $region72
        $region71: #{tpu_custom_call.1} parent=67 // pred_region
          %s1123 = sand.u32 %s186, 1
          %s1124 = scalar_lea.sflag [#allocation4], %s1123
          %s1125 = sand.u32 %s186, 1
          %s1126 = smul.addr %s1125, 64
          %s1127 = scalar_lea.vmem [#allocation8], %s1126
          %1128 = dma.done %s1124, 1024
        $region72: #{tpu_custom_call.1} parent=67 // pred_fallthru
          _
      $region68: #{tpu_custom_call.1} parent=5 // pred_fallthru
        _
    $region6: #{tpu_custom_call.1} parent=1 // loop_footer
      %s24 = sadd.s32 1, %s20
    $region7: #{tpu_custom_call.1} parent=1 // loop_footer_branch
      %19 = sbr.rel target = $region3
    $region8: #{tpu_custom_call.1} parent=1 // loop_exit
      _
    %1129 = vsyncpa [#allocation3], 1
    %s1130 = scalar_lea.sflag [#allocation3], 1
    %1131 = vsyncpa %s1130, 1
    %1132 = vsyncpa [#allocation6], 1
    %1133 = vsyncpa [#allocation4], 1
    %s1134 = scalar_lea.sflag [#allocation4], 1
    %1135 = vsyncpa %s1134, 1

</llo_original>
